<compile_context>
chip_gen: v6e
topology: v6e:2x2x1
jax: 0.10.0
libtpu: 0.0.40
codegen_flags: <defaults>
</compile_context>

<pallas_src>
import functools

import numpy as np

import jax
import jax.numpy as jnp
from jax.experimental import pallas as pl
from jax.experimental.pallas import tpu as pltpu


def _bilinear_matrix(out_size: int, in_size: int) -> np.ndarray:
    """1-D linear interpolation matrix with align_corners=True semantics."""
    if out_size == 1:
        coords = np.zeros((1,), dtype=np.float64)
    else:
        coords = (
            np.arange(out_size, dtype=np.float64) * (in_size - 1) / (out_size - 1)
        )
    lo = np.clip(np.floor(coords).astype(np.int64), 0, in_size - 1)
    hi = np.clip(lo + 1, 0, in_size - 1)
    frac = (coords - lo).astype(np.float32)
    w = np.zeros((out_size, in_size), dtype=np.float32)
    rows = np.arange(out_size)
    np.add.at(w, (rows, lo), 1.0 - frac)
    np.add.at(w, (rows, hi), frac)
    return w


def _upsample_kernel(x_ref, wwt_ref, wh_ref, o_ref, *, bc, h_in, h_out, w_out,
                     acc_dtype):
    """One grid step: bilinearly upsample `bc` channels folded along sublanes.

    x_ref:   (1, bc*h_in, w_in)   bc channels stacked along the sublane axis
    wwt_ref: (w_in, w_out)        width interpolation matrix (transposed)
    wh_ref:  (h_out, h_in)        height interpolation matrix
    o_ref:   (1, bc, h_out, w_out)
    """
    x2 = x_ref[0]                                                # (bc*h_in, w_in)

    # ---- width pass: one MXU matmul with a large M = bc*h_in --------------
    t = jnp.dot(x2, wwt_ref[...], preferred_element_type=acc_dtype)
    # t: (bc*h_in, w_out)

    # ---- height pass: per-channel matmul over the folded channels ---------
    if bc == 1:
        out2 = jnp.dot(wh_ref[...], t, preferred_element_type=jnp.float32)
        o_ref[0, 0] = out2.astype(o_ref.dtype)
    else:
        # Sublane split is layout-preserving because h_in % 8 == 0 (enforced
        # by _pick_bc before choosing bc > 1).
        t3 = t.reshape(bc, h_in, w_out)                          # (bc, h_in, w_out)
        # Broadcast of the tiny shared weight along a new leading dim is a
        # cheap vreg replication (done once per grid step).
        wh_b = jnp.broadcast_to(wh_ref[...], (bc, h_out, h_in))
        out3 = jnp.einsum("boh,bhw->bow", wh_b, t3,
                          preferred_element_type=jnp.float32)    # (bc, h_out, w_out)
        o_ref[0] = out3.astype(o_ref.dtype)


def _vmem_limit_bytes() -> int:
    """Generation-aware VMEM limit: 48 MiB on v7x (64 MiB VMEM), 64 MiB on
    v5e/v6e (128 MiB VMEM).  Falls back to the conservative 48 MiB."""
    cap = 64 * 1024 * 1024
    try:
        cap = int(pltpu.get_tpu_info().vmem_capacity_bytes)
    except Exception:
        pass
    return int(min((cap // 4) * 3, 64 * 1024 * 1024))


def _pick_bc(nc, h_in, w_in, h_out, w_out,
             x_itemsize, w_itemsize, acc_itemsize, vmem_budget):
    """Largest channel batch Bc (dividing N*C) whose per-step working set —
    padded to the (8,128) vreg tiling and including the f32 intermediates and
    double-buffered data blocks — fits `vmem_budget`, while keeping enough
    grid steps for megacore sharding (v7x: 2 TensorCores) and pipelining."""
    def pad8(v):
        return -(-v // 8) * 8

    def pad128(v):
        return -(-v // 128) * 128

    # bc > 1 relies on a layout-preserving sublane split (h_in % 8 == 0).
    if h_in % 8 != 0:
        return 1

    def step_bytes(bc):
        in_b = 2 * bc * pad8(h_in) * pad128(w_in) * x_itemsize       # dbl-buffered
        out_b = 2 * bc * pad8(h_out) * pad128(w_out) * x_itemsize    # dbl-buffered
        wwt_b = 2 * pad8(w_in) * pad128(w_out) * w_itemsize          # tiny weights
        wh_b = 2 * pad8(h_out) * pad128(h_in) * w_itemsize           # tiny weights
        whbc_b = bc * pad8(h_out) * pad128(h_in) * w_itemsize        # in-kernel bcast
        t_b = bc * pad8(h_in) * pad128(w_out) * acc_itemsize         # width-pass out
        acc_b = bc * pad8(h_out) * pad128(w_out) * 4                 # f32 2nd-dot out
        return in_b + out_b + wwt_b + wh_b + whbc_b + t_b + acc_b

    # >= 2 steps so both v7x TensorCores get work; a few more when there is
    # plenty of work, so DMAs and compute overlap across grid steps.
    if nc >= 32:
        min_steps = 4
    elif nc >= 2:
        min_steps = 2
    else:
        min_steps = 1

    best = 1
    for bc in range(1, nc + 1):
        if nc % bc:
            continue
        if nc // bc < min_steps:
            continue
        if step_bytes(bc) <= vmem_budget:
            best = max(best, bc)
    return best


@functools.partial(jax.jit, static_argnames=("upsample_scale", "target_shape"))
def upsample2d_bilinear(x, upsample_scale=None, target_shape=None):
    """Equivalent of UpSample2D.forward with mode='bilinear', align_corners=True.

    x: (N, C, H, W)
    """
    n, c, h_in, w_in = x.shape
    if target_shape is None:
        assert upsample_scale is not None
        target_shape = (h_in * upsample_scale, w_in * upsample_scale)
    h_out, w_out = target_shape
    nc = n * c

    if x.dtype == jnp.bfloat16:
        w_dtype = jnp.bfloat16      # MXU-native; fractions quantized to bf16
        acc_dtype = jnp.bfloat16    # avoids an f32->bf16 cast pass on t
    else:
        w_dtype = jnp.float32
        acc_dtype = jnp.float32

    vmem_limit = _vmem_limit_bytes()
    bc = _pick_bc(
        nc, h_in, w_in, h_out, w_out,
        x.dtype.itemsize,
        jnp.dtype(w_dtype).itemsize,
        jnp.dtype(acc_dtype).itemsize,
        vmem_budget=vmem_limit - 4 * 1024 * 1024,   # headroom for compiler scratch
    )
    g = nc // bc

    # Tiny shared interpolation matrices (compile-time constants).
    wwt = jnp.asarray(_bilinear_matrix(w_out, w_in).T, dtype=w_dtype)  # (w_in, w_out)
    wh = jnp.asarray(_bilinear_matrix(h_out, h_in), dtype=w_dtype)     # (h_out, h_in)

    # Pure reshape: channels fold into the SUBLANE axis — no HBM transpose.
    x_fold = x.reshape(g, bc * h_in, w_in)

    kernel = functools.partial(
        _upsample_kernel,
        bc=bc, h_in=h_in, h_out=h_out, w_out=w_out, acc_dtype=acc_dtype)

    out = pl.pallas_call(
        kernel,
        out_shape=jax.ShapeDtypeStruct((g, bc, h_out, w_out), x.dtype),
        grid_spec=pltpu.PrefetchScalarGridSpec(
            num_scalar_prefetch=0,
            grid=(g,),
            in_specs=[
                pl.BlockSpec((1, bc * h_in, w_in), lambda i: (i, 0, 0)),
                pl.BlockSpec((w_in, w_out), lambda i: (0, 0)),
                pl.BlockSpec((h_out, h_in), lambda i: (0, 0)),
            ],
            out_specs=pl.BlockSpec((1, bc, h_out, w_out),
                                   lambda i: (i, 0, 0, 0)),
        ),
        compiler_params=pltpu.CompilerParams(
            dimension_semantics=("parallel",),
            vmem_limit_bytes=vmem_limit,
        ),
    )(x_fold, wwt, wh)

    # Pure reshape back to NCHW — no transpose on the output side either.
    return out.reshape(n, c, h_out, w_out)


def _reference_bilinear(x, target_shape):
    """Pure-JAX reference (same math, dense einsum) for a sanity check."""
    h_out, w_out = target_shape
    _, _, h_in, w_in = x.shape
    wh = jnp.asarray(_bilinear_matrix(h_out, h_in))
    ww = jnp.asarray(_bilinear_matrix(w_out, w_in))
    return jnp.einsum(
        "oh,nchw,pw->ncop", wh, x.astype(jnp.float32), ww
    ).astype(x.dtype)


if __name__ == "__main__":
    key = jax.random.PRNGKey(0)
    x = jax.random.normal(key, (2, 4, 16, 16), dtype=jnp.float32)

    out = upsample2d_bilinear(x, upsample_scale=2)
    out = jax.block_until_ready(out)

    assert out.shape == (2, 4, 32, 32), out.shape
    assert out.dtype == x.dtype

    ref = _reference_bilinear(x, (32, 32))
    assert jnp.allclose(out, ref, atol=1e-5, rtol=1e-5), "mismatch vs reference"

    print("KERNEL_OK")
</pallas_src>

<mosaic_0001>
module attributes {stable_mosaic.version = 11 : i64} {
  func.func @_upsample_kernel(%arg0: i32, %arg1: memref<1x64x16xf32, #tpu.memory_space<vmem>>, %arg2: memref<16x32xf32, #tpu.memory_space<vmem>>, %arg3: memref<32x16xf32, #tpu.memory_space<vmem>>, %arg4: memref<1x4x32x32xf32, #tpu.memory_space<vmem>>) attributes {dimension_semantics = [#tpu.dimension_semantics<parallel>], iteration_bounds = array<i64: 2>, scalar_prefetch = 0 : i64, scratch_operands = 0 : i64, tpu.core_type = #tpu.core_type<tc>, window_params = [{transform_indices = @transform_0, window_bounds = array<i64: 1, 64, 16>}, {pipeline_mode = #tpu.pipeline_mode<synchronous>, transform_indices = @transform_1, window_bounds = array<i64: 16, 32>}, {pipeline_mode = #tpu.pipeline_mode<synchronous>, transform_indices = @transform_2, window_bounds = array<i64: 32, 16>}, {transform_indices = @transform_3, window_bounds = array<i64: 1, 4, 32, 32>}]} {
    %c0 = arith.constant 0 : index
    %c0_0 = arith.constant 0 : index
    %c0_1 = arith.constant 0 : index
    %0 = vector.load %arg1[%c0, %c0_0, %c0_1] : memref<1x64x16xf32, #tpu.memory_space<vmem>>, vector<1x64x16xf32>
    %1 = vector.shape_cast %0 : vector<1x64x16xf32> to vector<64x16xf32>
    %c0_2 = arith.constant 0 : index
    %c0_3 = arith.constant 0 : index
    %2 = vector.load %arg2[%c0_2, %c0_3] : memref<16x32xf32, #tpu.memory_space<vmem>>, vector<16x32xf32>
    %cst = arith.constant dense<0.000000e+00> : vector<64x32xf32>
    %3 = tpu.matmul %1, %2, %cst {dimension_numbers = #tpu.dot_dimension_numbers<[1], [0], [0], [1], [0, 0, 1, 1], [], []>} : vector<64x16xf32>, vector<16x32xf32>, vector<64x32xf32> -> vector<64x32xf32>
    %4 = vector.shape_cast %3 : vector<64x32xf32> to vector<4x16x32xf32>
    %c0_4 = arith.constant 0 : index
    %c0_5 = arith.constant 0 : index
    %5 = vector.load %arg3[%c0_4, %c0_5] : memref<32x16xf32, #tpu.memory_space<vmem>>, vector<32x16xf32>
    %6 = vector.shape_cast %5 : vector<32x16xf32> to vector<1x32x16xf32>
    %7 = vector.broadcast %6 : vector<1x32x16xf32> to vector<4x32x16xf32>
    "tpu.trace_start"() <{level = 10 : i32, message = "boh,bhw->bow"}> : () -> ()
    %cst_6 = arith.constant dense<0.000000e+00> : vector<4x32x32xf32>
    %8 = tpu.matmul %7, %4, %cst_6 {dimension_numbers = #tpu.dot_dimension_numbers<[2], [1], [1], [2], [0, 0, 0, 1, 1, 2], [0], [0]>} : vector<4x32x16xf32>, vector<4x16x32xf32>, vector<4x32x32xf32> -> vector<4x32x32xf32>
    "tpu.trace_stop"() : () -> ()
    %c0_7 = arith.constant 0 : index
    %c0_8 = arith.constant 0 : index
    %c0_9 = arith.constant 0 : index
    %c0_10 = arith.constant 0 : index
    %9 = vector.load %arg4[%c0_7, %c0_8, %c0_9, %c0_10] : memref<1x4x32x32xf32, #tpu.memory_space<vmem>>, vector<1x4x32x32xf32>
    %10 = vector.shape_cast %9 : vector<1x4x32x32xf32> to vector<4x32x32xf32>
    %11 = vector.shape_cast %8 : vector<4x32x32xf32> to vector<1x4x32x32xf32>
    tpu.vector_store %arg4[%c0_7, %c0_8, %c0_9, %c0_10], %11 {strides = array<i32>} : memref<1x4x32x32xf32, #tpu.memory_space<vmem>>, vector<1x4x32x32xf32>,
    return
  }
  func.func @transform_0(%arg0: i32) -> (i32, i32, i32) {
    %c0_i32 = arith.constant 0 : i32
    %c0_i32_0 = arith.constant 0 : i32
    %c0_i32_1 = arith.constant 0 : i32
    return %arg0, %c0_i32, %c0_i32_0 : i32, i32, i32
  }
  func.func @transform_1(%arg0: i32) -> (i32, i32) {
    %c0_i32 = arith.constant 0 : i32
    %c0_i32_0 = arith.constant 0 : i32
    %c0_i32_1 = arith.constant 0 : i32
    return %c0_i32, %c0_i32_0 : i32, i32
  }
  func.func @transform_2(%arg0: i32) -> (i32, i32) {
    %c0_i32 = arith.constant 0 : i32
    %c0_i32_0 = arith.constant 0 : i32
    %c0_i32_1 = arith.constant 0 : i32
    return %c0_i32, %c0_i32_0 : i32, i32
  }
  func.func @transform_3(%arg0: i32) -> (i32, i32, i32, i32) {
    %c0_i32 = arith.constant 0 : i32
    %c0_i32_0 = arith.constant 0 : i32
    %c0_i32_1 = arith.constant 0 : i32
    %c0_i32_2 = arith.constant 0 : i32
    return %arg0, %c0_i32, %c0_i32_0, %c0_i32_1 : i32, i32, i32, i32
  }
}

</mosaic_0001>

<llo_original>
// kernel: upsample2d_bilinear.1
$region0: #{upsample2d_bilinear.1}
  #allocation0 [shape = 'u32[]', space=smem, size = 0x4, offset = 0x4, fixed_abs, tag = 'smem constant byte address 0x4 - core index']
  #allocation1 [shape = 'u32[144,128]{1,0:T(1,128)}', space=vmem, size = 0x12000, scoped, tag = 'internal scratch']
  %s0 = inlined_call_operand.hbm [shape: f32[2,64,16], index: 0, kind: input, shape index: {}]
  %s1 = inlined_call_operand.hbm [shape: f32[16,32], index: 1, kind: input, shape index: {}]
  %s2 = inlined_call_operand.hbm [shape: f32[32,16], index: 2, kind: input, shape index: {}]
  %s3 = inlined_call_operand.hbm [shape: f32[2,4,32,32], index: 3, kind: output, shape index: {}]
  %s4 = sld [smem:[#allocation0]]
  $region57: #{upsample2d_bilinear.1} parent=0
    _
  %s6 = ssub.s32 1, %s4
  %s7 = scalar_select 0, %s6, %s4
  $region1: #{upsample2d_bilinear.1} parent=0
    #allocation2 [shape = 'u8[65536]{0}', space=vmem, size = 0x10000, scoped, tag = 'input window, operand 0']
    #allocation3 [shape = 's32[2]{0}', space=sflag, size = 0x8, scoped, tag = 'scoped memory for upsample2d_bilinear.1']
    #allocation4 [shape = 's32[2]{0}', space=sflag, size = 0x8, scoped, tag = 'scoped memory for upsample2d_bilinear.1']
    #allocation5 [shape = 'u8[8192]{0}', space=vmem, size = 0x2000, scoped, tag = 'input window, operand 1, single buffered']
    #allocation6 [shape = 's32[1]{0}', space=sflag, size = 0x4, scoped, tag = 'scoped memory for upsample2d_bilinear.1']
    #allocation7 [shape = 'u8[16384]{0}', space=vmem, size = 0x4000, scoped, tag = 'input window, operand 2, single buffered']
    #allocation8 [shape = 'u8[131072]{0}', space=vmem, size = 0x20000, scoped, tag = 'output window, operand 0']
    %8 = vsyncpa [#allocation3], 0
    %s9 = scalar_lea.sflag [#allocation3], 1
    %10 = vsyncpa %s9, 0
    %11 = vsyncpa [#allocation6], 0
    %12 = vsyncpa [#allocation4], 0
    %s13 = scalar_lea.sflag [#allocation4], 1
    %14 = vsyncpa %s13, 0
    loop: start=0, step=1, limit=4
    $region2: #{upsample2d_bilinear.1} parent=1 // loop_pre_header
      _
    $region3: #{upsample2d_bilinear.1} parent=1 // loop_header
      %s16 = sphi 0, %s20
      %p17 = scmp.ge.s32.totalorder %s16, 4
      %s26 = sphi 0, %s28
      %s29 = sphi 0, %s26
      %s30 = sphi 0, %s29
      %s46 = sphi 0, %s30
      %s50 = sphi 0, %s50
      %s52 = sphi 0, %s50
      %s53 = sphi 0, %s52
      %s67 = sphi 0, %s53
      %s71 = sphi 0, %s71
      %s73 = sphi 0, %s71
      %s74 = sphi 0, %s73
      %s88 = sphi 0, %s74
      %s94 = sphi 0, %s96
      %s97 = sphi 0, %s94
      %s98 = sphi 0, %s97
      %s114 = sphi 0, %s98
    $region4: #{upsample2d_bilinear.1} parent=1 // loop_header_branch
      %19 = sbr.rel (%p17) target = $region8
    $region5: #{upsample2d_bilinear.1} parent=1 // loop_body
      %s21 = ssub.s32 %s16, 1
      %s22 = ssub.s32 %s16, 2
      %s23 = sadd.s32 %s16, 1
      %s24 = ssub.s32 %s16, %s23
      %p25 = scmp.eq.s32.totalorder %s24, 0
      %s27 = sadd.s32 %s26, 1
      %s28 = scalar_select %p25, %s26, %s27
      %p31 = pneg %p25
      %p32 = scmp.eq.s32.totalorder %s16, 1
      %p33 = por %p31, %p32
      %p34 = scmp.ne.s32.totalorder %s26, %s29
      %p35 = scmp.eq.s32.totalorder %s16, 0
      %p36 = por %p34, %p35
      %p37 = scmp.ne.s32.totalorder %s26, %s29
      %p38 = scmp.eq.s32.totalorder %s21, 1
      %p39 = por %p37, %p38
      %p40 = scmp.ne.s32.totalorder %s29, %s30
      %p41 = scmp.eq.s32.totalorder %s21, 0
      %p42 = por %p40, %p41
      %p43 = scmp.ne.s32.totalorder %s29, %s30
      %p44 = scmp.eq.s32.totalorder %s22, 1
      %p45 = por %p43, %p44
      %p47 = scmp.ne.s32.totalorder %s30, %s46
      %p48 = scmp.eq.s32.totalorder %s22, 0
      %p49 = por %p47, %p48
      %s51 = sadd.s32 %s50, 1
      %p54 = scmp.eq.s32.totalorder %s16, 1
      %p55 = scmp.ne.s32.totalorder %s50, %s52
      %p56 = scmp.eq.s32.totalorder %s16, 0
      %p57 = por %p55, %p56
      %p58 = scmp.ne.s32.totalorder %s50, %s52
      %p59 = scmp.eq.s32.totalorder %s21, 1
      %p60 = por %p58, %p59
      %p61 = scmp.ne.s32.totalorder %s52, %s53
      %p62 = scmp.eq.s32.totalorder %s21, 0
      %p63 = por %p61, %p62
      %p64 = scmp.ne.s32.totalorder %s52, %s53
      %p65 = scmp.eq.s32.totalorder %s22, 1
      %p66 = por %p64, %p65
      %p68 = scmp.ne.s32.totalorder %s53, %s67
      %p69 = scmp.eq.s32.totalorder %s22, 0
      %p70 = por %p68, %p69
      %s72 = sadd.s32 %s71, 1
      %p75 = scmp.eq.s32.totalorder %s16, 1
      %p76 = scmp.ne.s32.totalorder %s71, %s73
      %p77 = scmp.eq.s32.totalorder %s16, 0
      %p78 = por %p76, %p77
      %p79 = scmp.ne.s32.totalorder %s71, %s73
      %p80 = scmp.eq.s32.totalorder %s21, 1
      %p81 = por %p79, %p80
      %p82 = scmp.ne.s32.totalorder %s73, %s74
      %p83 = scmp.eq.s32.totalorder %s21, 0
      %p84 = por %p82, %p83
      %p85 = scmp.ne.s32.totalorder %s73, %s74
      %p86 = scmp.eq.s32.totalorder %s22, 1
      %p87 = por %p85, %p86
      %p89 = scmp.ne.s32.totalorder %s74, %s88
      %p90 = scmp.eq.s32.totalorder %s22, 0
      %p91 = por %p89, %p90
      %s92 = ssub.s32 %s16, %s23
      %p93 = scmp.eq.s32.totalorder %s92, 0
      %s95 = sadd.s32 %s94, 1
      %s96 = scalar_select %p93, %s94, %s95
      %p99 = pneg %p93
      %p100 = scmp.eq.s32.totalorder %s16, 1
      %p101 = por %p99, %p100
      %p102 = scmp.ne.s32.totalorder %s94, %s97
      %p103 = scmp.eq.s32.totalorder %s16, 0
      %p104 = por %p102, %p103
      %p105 = scmp.ne.s32.totalorder %s94, %s97
      %p106 = scmp.eq.s32.totalorder %s21, 1
      %p107 = por %p105, %p106
      %p108 = scmp.ne.s32.totalorder %s97, %s98
      %p109 = scmp.eq.s32.totalorder %s21, 0
      %p110 = por %p108, %p109
      %p111 = scmp.ne.s32.totalorder %s97, %s98
      %p112 = scmp.eq.s32.totalorder %s22, 1
      %p113 = por %p111, %p112
      %p115 = scmp.ne.s32.totalorder %s98, %s114
      %p116 = scmp.eq.s32.totalorder %s22, 0
      %p117 = por %p115, %p116
      %p118 = scmp.le.s32.totalorder 1, %s16
      %p119 = scmp.lt.s32.totalorder %s16, 3
      %p120 = pnand %p118, %p119
      %p121 = pneg %p120
      // Predicated region
      $region9: #{upsample2d_bilinear.1} parent=5 // pred_check
        _
      $region10: #{upsample2d_bilinear.1} parent=5 // pred_check_branch
        %123 = sbr.rel (%p120) target = $region12
      $region11: #{upsample2d_bilinear.1} parent=5 // pred_region
        %s124 = ssub.s32 %s16, 1
        // Predicated region
        $region13: #{upsample2d_bilinear.1} parent=11 // pred_check
          %p125 = pneg %p63
        $region14: #{upsample2d_bilinear.1} parent=11 // pred_check_branch
          %127 = sbr.rel (%p125) target = $region16
        $region15: #{upsample2d_bilinear.1} parent=11 // pred_region
          %s129 = ssub.s32 256, 256
          %130 = vsyncadd [#allocation6], %s129
          %s131 = sshll.u32 [#allocation5], 4
          %s132 = int_to_ptr.vmem [resolvable:$true] %s131
          %137 = dma.hbm_to_vmem [thread:$0]  %s1, 256, %s132, [#allocation6], 128, 128, 8
        $region16: #{upsample2d_bilinear.1} parent=11 // pred_fallthru
          _
        // Predicated region
        $region17: #{upsample2d_bilinear.1} parent=11 // pred_check
          %p138 = pneg %p84
        $region18: #{upsample2d_bilinear.1} parent=11 // pred_check_branch
          %140 = sbr.rel (%p138) target = $region20
        $region19: #{upsample2d_bilinear.1} parent=11 // pred_region
          %s142 = ssub.s32 512, 512
          %143 = vsyncadd [#allocation6], %s142
          %s144 = sshll.u32 [#allocation7], 4
          %s145 = int_to_ptr.vmem [resolvable:$true] %s144
          %150 = dma.hbm_to_vmem [thread:$0]  %s2, 512, %s145, [#allocation6], 128, 128, 8
        $region20: #{upsample2d_bilinear.1} parent=11 // pred_fallthru
          _
      $region12: #{upsample2d_bilinear.1} parent=5 // pred_fallthru
        _
      %p151 = scmp.lt.s32.totalorder %s16, 2
      // Predicated region
      $region21: #{upsample2d_bilinear.1} parent=5 // pred_check
        %p152 = pneg %p151
      $region22: #{upsample2d_bilinear.1} parent=5 // pred_check_branch
        %154 = sbr.rel (%p152) target = $region24
      $region23: #{upsample2d_bilinear.1} parent=5 // pred_region
        // Predicated region
        $region25: #{upsample2d_bilinear.1} parent=23 // pred_check
          %p155 = pneg %p36
        $region26: #{upsample2d_bilinear.1} parent=23 // pred_check_branch
          %157 = sbr.rel (%p155) target = $region28
        $region27: #{upsample2d_bilinear.1} parent=23 // pred_region
          %s158 = sand.u32 %s26, 1
          %s159 = scalar_lea.sflag [#allocation3], %s158
          %s160 = sand.u32 %s26, 1
          %s161 = smul.addr %s160, 64
          %s162 = scalar_lea.vmem [#allocation2], %s161
          %s164 = ssub.s32 1024, 1024
          %165 = vsyncadd %s159, %s164
          %s166 = smul.addr %s16, 8
          %s167 = smul.addr %s166, 128
          %s168 = scalar_lea.hbm %s0, %s167
          %s169 = sshll.u32 %s162, 4
          %s170 = int_to_ptr.vmem [resolvable:$true] %s169
          %175 = dma.hbm_to_vmem [thread:$0]  %s168, 1024, %s170, %s159, 128, 128, 8
        $region28: #{upsample2d_bilinear.1} parent=23 // pred_fallthru
          _
      $region24: #{upsample2d_bilinear.1} parent=5 // pred_fallthru
        _
      %p176 = scmp.le.s32.totalorder 1, %s16
      %p177 = scmp.lt.s32.totalorder %s16, 3
      %p178 = pnand %p176, %p177
      %p179 = pneg %p178
      // Predicated region
      $region29: #{upsample2d_bilinear.1} parent=5 // pred_check
        _
      $region30: #{upsample2d_bilinear.1} parent=5 // pred_check_branch
        %181 = sbr.rel (%p178) target = $region32
      $region31: #{upsample2d_bilinear.1} parent=5 // pred_region
        %s182 = ssub.s32 %s16, 1
        %s183 = sand.u32 %s29, 1
        %s184 = scalar_lea.sflag [#allocation3], %s183
        %s185 = sand.u32 %s29, 1
        %s186 = smul.addr %s185, 64
        %s187 = scalar_lea.vmem [#allocation2], %s186
        // Predicated region
        $region33: #{upsample2d_bilinear.1} parent=31 // pred_check
          %p188 = pneg %p42
        $region34: #{upsample2d_bilinear.1} parent=31 // pred_check_branch
          %190 = sbr.rel (%p188) target = $region36
        $region35: #{upsample2d_bilinear.1} parent=31 // pred_region
          %191 = dma.done %s184, 1024
        $region36: #{upsample2d_bilinear.1} parent=31 // pred_fallthru
          _
        // Predicated region
        $region37: #{upsample2d_bilinear.1} parent=31 // pred_check
          %p192 = pneg %p63
        $region38: #{upsample2d_bilinear.1} parent=31 // pred_check_branch
          %194 = sbr.rel (%p192) target = $region40
        $region39: #{upsample2d_bilinear.1} parent=31 // pred_region
          %195 = dma.done [#allocation6], 256
        $region40: #{upsample2d_bilinear.1} parent=31 // pred_fallthru
          _
        // Predicated region
        $region41: #{upsample2d_bilinear.1} parent=31 // pred_check
          %p196 = pneg %p84
        $region42: #{upsample2d_bilinear.1} parent=31 // pred_check_branch
          %198 = sbr.rel (%p196) target = $region44
        $region43: #{upsample2d_bilinear.1} parent=31 // pred_region
          %199 = dma.done [#allocation6], 512
        $region44: #{upsample2d_bilinear.1} parent=31 // pred_fallthru
          _
        %s200 = sand.u32 %s29, 1
        %s201 = scalar_lea.sflag [#allocation3], %s200
        %s202 = sand.u32 %s29, 1
        %s203 = smul.addr %s202, 64
        %s204 = scalar_lea.vmem [#allocation2], %s203
        %p205 = pneg %p42
        %p206 = pneg %p39
        %p207 = pneg %p63
        %p208 = pneg %p60
        %p209 = pneg %p84
        %p210 = pneg %p81
        %p211 = pneg %p110
        %p212 = pneg %p107
        %s213 = sand.u32 %s97, 1
        %s214 = scalar_lea.sflag [#allocation4], %s213
        %s215 = sand.u32 %s97, 1
        %s216 = smul.addr %s215, 128
        %s217 = scalar_lea.vmem [#allocation8], %s216
        %v218 = vld [vmem:[%s187] sm:$0xff]
        %v219 = vld [vmem:[%s187 + $0x8] sm:$0xff]
        %v220 = vld [vmem:[%s187 + $0x10] sm:$0xff]
        %v221 = vld [vmem:[%s187 + $0x18] sm:$0xff]
        %v222 = vld [vmem:[%s187 + $0x20] sm:$0xff]
        %v223 = vld [vmem:[%s187 + $0x28] sm:$0xff]
        %v224 = vld [vmem:[%s187 + $0x30] sm:$0xff]
        %v225 = vld [vmem:[%s187 + $0x38] sm:$0xff]
        %v226 = vld [vmem:[#allocation5] sm:$0xff]
        %v227 = vld [vmem:[#allocation5 + $0x8] sm:$0xff]
        %vm228 = vcmask 130048
        %v230 = vsel %vm228, %v218, 0
        %v233 = vsel %vm228, %v219, 0
        %v236 = vsel %vm228, %v220, 0
        %v239 = vsel %vm228, %v221, 0
        %v242 = vsel %vm228, %v222, 0
        %v245 = vsel %vm228, %v223, 0
        %v248 = vsel %vm228, %v224, 0
        %v251 = vsel %vm228, %v225, 0
        %253 = vmatprep.subr.mxu0 0.0
        %254 = vmatpush1.msra.mxu0 0.0
        %255 = vmatprep.subr.mxu0 0.0
        %256 = vmatpush1.msra.mxu0 0.0
        %257 = vmatprep.subr.mxu0 0.0
        %258 = vmatpush1.msra.mxu0 0.0
        %259 = vmatprep.subr.mxu0 0.0
        %260 = vmatpush1.msra.mxu0 0.0
        %261 = vmatprep.subr.mxu0 0.0
        %262 = vmatpush1.msra.mxu0 0.0
        %263 = vmatprep.subr.mxu0 0.0
        %264 = vmatpush1.msra.mxu0 0.0
        %265 = vmatprep.subr.mxu0 0.0
        %266 = vmatpush1.msra.mxu0 0.0
        %267 = vmatprep.subr.mxu0 0.0
        %268 = vmatpush1.msra.mxu0 0.0
        %269 = vmatprep.subr.mxu0 0.0
        %270 = vmatpush1.msra.mxu0 0.0
        %271 = vmatprep.subr.mxu0 0.0
        %272 = vmatpush1.msra.mxu0 0.0
        %273 = vmatprep.subr.mxu0 0.0
        %274 = vmatpush1.msra.mxu0 0.0
        %275 = vmatprep.subr.mxu0 0.0
        %276 = vmatpush1.msra.mxu0 0.0
        %277 = vmatprep.subr.mxu0 0.0
        %278 = vmatpush1.msra.mxu0 0.0
        %279 = vmatprep.subr.mxu0 0.0
        %280 = vmatpush1.msra.mxu0 0.0
        %281 = vmatprep.subr.mxu0 0.0
        %282 = vmatpush1.msra.mxu0 %v227
        %283 = vmatprep.subr.mxu0 0.0
        %284 = vmatpush1.msra.mxu0 %v226
        %285 = vmatprep.subr.mxu0 0.0
        %286 = vmatpush2.msra.mxu0 0.0
        %287 = vmatprep.subr.mxu0 0.0
        %288 = vmatpush2.msra.mxu0 0.0
        %289 = vmatprep.subr.mxu0 0.0
        %290 = vmatpush2.msra.mxu0 0.0
        %291 = vmatprep.subr.mxu0 0.0
        %292 = vmatpush2.msra.mxu0 0.0
        %293 = vmatprep.subr.mxu0 0.0
        %294 = vmatpush2.msra.mxu0 0.0
        %295 = vmatprep.subr.mxu0 0.0
        %296 = vmatpush2.msra.mxu0 0.0
        %297 = vmatprep.subr.mxu0 0.0
        %298 = vmatpush2.msra.mxu0 0.0
        %299 = vmatprep.subr.mxu0 0.0
        %300 = vmatpush2.msra.mxu0 0.0
        %301 = vmatprep.subr.mxu0 0.0
        %302 = vmatpush2.msra.mxu0 0.0
        %303 = vmatprep.subr.mxu0 0.0
        %304 = vmatpush2.msra.mxu0 0.0
        %305 = vmatprep.subr.mxu0 0.0
        %306 = vmatpush2.msra.mxu0 0.0
        %307 = vmatprep.subr.mxu0 0.0
        %308 = vmatpush2.msra.mxu0 0.0
        %309 = vmatprep.subr.mxu0 0.0
        %310 = vmatpush2.msra.mxu0 0.0
        %311 = vmatprep.subr.mxu0 0.0
        %312 = vmatpush2.msra.mxu0 0.0
        %313 = vmatprep.subr.mxu0 0.0
        %314 = vmatpush2.msra.mxu0 0.0
        %315 = vmatprep.subr.mxu0 0.0
        %316 = vmatpush2.msra.mxu0 0.0
        %317 = vmatprep.mubr.f32.mxu0 0.0
        %318 = vmatmul.mubr.f32.gmra.mxu0 %v230
        %v319 = vpop.f32.mrf.mxu0
        %v320 = vadd.f32 0.0, %v319
        %v321 = vpop.f32.mrf.mxu0
        %322 = vmatprep.mubr.f32.mxu0 0.0
        %323 = vmatmul.mubr.f32.gmra.mxu0 %v233
        %v324 = vpop.f32.mrf.mxu0
        %v325 = vadd.f32 0.0, %v324
        %v326 = vpop.f32.mrf.mxu0
        %327 = vmatprep.mubr.f32.mxu0 0.0
        %328 = vmatmul.mubr.f32.gmra.mxu0 %v236
        %v329 = vpop.f32.mrf.mxu0
        %v330 = vadd.f32 0.0, %v329
        %v331 = vpop.f32.mrf.mxu0
        %332 = vmatprep.mubr.f32.mxu0 0.0
        %333 = vmatmul.mubr.f32.gmra.mxu0 %v239
        %v334 = vpop.f32.mrf.mxu0
        %v335 = vadd.f32 0.0, %v334
        %v336 = vpop.f32.mrf.mxu0
        %337 = vmatprep.mubr.f32.mxu0 0.0
        %338 = vmatmul.mubr.f32.gmra.mxu0 %v242
        %v339 = vpop.f32.mrf.mxu0
        %v340 = vadd.f32 0.0, %v339
        %v341 = vpop.f32.mrf.mxu0
        %342 = vmatprep.mubr.f32.mxu0 0.0
        %343 = vmatmul.mubr.f32.gmra.mxu0 %v245
        %v344 = vpop.f32.mrf.mxu0
        %v345 = vadd.f32 0.0, %v344
        %v346 = vpop.f32.mrf.mxu0
        %347 = vmatprep.mubr.f32.mxu0 0.0
        %348 = vmatmul.mubr.f32.gmra.mxu0 %v248
        %v349 = vpop.f32.mrf.mxu0
        %v350 = vadd.f32 0.0, %v349
        %v351 = vpop.f32.mrf.mxu0
        %352 = vmatprep.mubr.f32.mxu0 0.0
        %353 = vmatmul.mubr.f32.gmra.mxu0 %v251
        %v354 = vpop.f32.mrf.mxu0
        %v355 = vadd.f32 0.0, %v354
        %v356 = vpop.f32.mrf.mxu0
        %357 = vdwg.mxu0
        %v358 = vld [vmem:[#allocation7] sm:$0xff]
        %v359 = vld [vmem:[#allocation7 + $0x8] sm:$0xff]
        %v360 = vld [vmem:[#allocation7 + $0x10] sm:$0xff]
        %v361 = vld [vmem:[#allocation7 + $0x18] sm:$0xff]
        %v363 = vsel %vm228, %v358, 0
        %v366 = vsel %vm228, %v359, 0
        %v369 = vsel %vm228, %v360, 0
        %v372 = vsel %vm228, %v361, 0
        %374 = vmatprep.subr.mxu0 0.0
        %375 = vmatpush1.msra.mxu0 0.0
        %376 = vmatprep.subr.mxu0 0.0
        %377 = vmatpush1.msra.mxu0 0.0
        %378 = vmatprep.subr.mxu0 0.0
        %379 = vmatpush1.msra.mxu0 0.0
        %380 = vmatprep.subr.mxu0 0.0
        %381 = vmatpush1.msra.mxu0 0.0
        %382 = vmatprep.subr.mxu0 0.0
        %383 = vmatpush1.msra.mxu0 0.0
        %384 = vmatprep.subr.mxu0 0.0
        %385 = vmatpush1.msra.mxu0 0.0
        %386 = vmatprep.subr.mxu0 0.0
        %387 = vmatpush1.msra.mxu0 0.0
        %388 = vmatprep.subr.mxu0 0.0
        %389 = vmatpush1.msra.mxu0 0.0
        %390 = vmatprep.subr.mxu0 0.0
        %391 = vmatpush1.msra.mxu0 0.0
        %392 = vmatprep.subr.mxu0 0.0
        %393 = vmatpush1.msra.mxu0 0.0
        %394 = vmatprep.subr.mxu0 0.0
        %395 = vmatpush1.msra.mxu0 0.0
        %396 = vmatprep.subr.mxu0 0.0
        %397 = vmatpush1.msra.mxu0 0.0
        %398 = vmatprep.subr.mxu0 0.0
        %399 = vmatpush1.msra.mxu0 0.0
        %400 = vmatprep.subr.mxu0 0.0
        %401 = vmatpush1.msra.mxu0 0.0
        %402 = vmatprep.subr.mxu0 0.0
        %403 = vmatpush1.msra.mxu0 %v325
        %404 = vmatprep.subr.mxu0 0.0
        %405 = vmatpush1.msra.mxu0 %v320
        %406 = vmatprep.subr.mxu0 0.0
        %407 = vmatpush2.msra.mxu0 0.0
        %408 = vmatprep.subr.mxu0 0.0
        %409 = vmatpush2.msra.mxu0 0.0
        %410 = vmatprep.subr.mxu0 0.0
        %411 = vmatpush2.msra.mxu0 0.0
        %412 = vmatprep.subr.mxu0 0.0
        %413 = vmatpush2.msra.mxu0 0.0
        %414 = vmatprep.subr.mxu0 0.0
        %415 = vmatpush2.msra.mxu0 0.0
        %416 = vmatprep.subr.mxu0 0.0
        %417 = vmatpush2.msra.mxu0 0.0
        %418 = vmatprep.subr.mxu0 0.0
        %419 = vmatpush2.msra.mxu0 0.0
        %420 = vmatprep.subr.mxu0 0.0
        %421 = vmatpush2.msra.mxu0 0.0
        %422 = vmatprep.subr.mxu0 0.0
        %423 = vmatpush2.msra.mxu0 0.0
        %424 = vmatprep.subr.mxu0 0.0
        %425 = vmatpush2.msra.mxu0 0.0
        %426 = vmatprep.subr.mxu0 0.0
        %427 = vmatpush2.msra.mxu0 0.0
        %428 = vmatprep.subr.mxu0 0.0
        %429 = vmatpush2.msra.mxu0 0.0
        %430 = vmatprep.subr.mxu0 0.0
        %431 = vmatpush2.msra.mxu0 0.0
        %432 = vmatprep.subr.mxu0 0.0
        %433 = vmatpush2.msra.mxu0 0.0
        %434 = vmatprep.subr.mxu0 0.0
        %435 = vmatpush2.msra.mxu0 0.0
        %436 = vmatprep.subr.mxu0 0.0
        %437 = vmatpush2.msra.mxu0 0.0
        %438 = vmatprep.mubr.f32.mxu0 0.0
        %439 = vmatmul.mubr.f32.gmra.mxu0 %v363
        %v440 = vpop.f32.mrf.mxu0
        %v441 = vadd.f32 0.0, %v440
        %v442 = vpop.f32.mrf.mxu0
        %443 = vmatprep.mubr.f32.mxu0 0.0
        %444 = vmatmul.mubr.f32.gmra.mxu0 %v366
        %v445 = vpop.f32.mrf.mxu0
        %v446 = vadd.f32 0.0, %v445
        %v447 = vpop.f32.mrf.mxu0
        %448 = vmatprep.mubr.f32.mxu0 0.0
        %449 = vmatmul.mubr.f32.gmra.mxu0 %v369
        %v450 = vpop.f32.mrf.mxu0
        %v451 = vadd.f32 0.0, %v450
        %v452 = vpop.f32.mrf.mxu0
        %453 = vmatprep.mubr.f32.mxu0 0.0
        %454 = vmatmul.mubr.f32.gmra.mxu0 %v372
        %v455 = vpop.f32.mrf.mxu0
        %v456 = vadd.f32 0.0, %v455
        %v457 = vpop.f32.mrf.mxu0
        %458 = vdwg.mxu0
        %459 = vmatprep.subr.mxu0 0.0
        %460 = vmatpush1.msra.mxu0 0.0
        %461 = vmatprep.subr.mxu0 0.0
        %462 = vmatpush1.msra.mxu0 0.0
        %463 = vmatprep.subr.mxu0 0.0
        %464 = vmatpush1.msra.mxu0 0.0
        %465 = vmatprep.subr.mxu0 0.0
        %466 = vmatpush1.msra.mxu0 0.0
        %467 = vmatprep.subr.mxu0 0.0
        %468 = vmatpush1.msra.mxu0 0.0
        %469 = vmatprep.subr.mxu0 0.0
        %470 = vmatpush1.msra.mxu0 0.0
        %471 = vmatprep.subr.mxu0 0.0
        %472 = vmatpush1.msra.mxu0 0.0
        %473 = vmatprep.subr.mxu0 0.0
        %474 = vmatpush1.msra.mxu0 0.0
        %475 = vmatprep.subr.mxu0 0.0
        %476 = vmatpush1.msra.mxu0 0.0
        %477 = vmatprep.subr.mxu0 0.0
        %478 = vmatpush1.msra.mxu0 0.0
        %479 = vmatprep.subr.mxu0 0.0
        %480 = vmatpush1.msra.mxu0 0.0
        %481 = vmatprep.subr.mxu0 0.0
        %482 = vmatpush1.msra.mxu0 0.0
        %483 = vmatprep.subr.mxu0 0.0
        %484 = vmatpush1.msra.mxu0 0.0
        %485 = vmatprep.subr.mxu0 0.0
        %486 = vmatpush1.msra.mxu0 0.0
        %487 = vmatprep.subr.mxu0 0.0
        %488 = vmatpush1.msra.mxu0 %v335
        %489 = vmatprep.subr.mxu0 0.0
        %490 = vmatpush1.msra.mxu0 %v330
        %491 = vmatprep.subr.mxu0 0.0
        %492 = vmatpush2.msra.mxu0 0.0
        %493 = vmatprep.subr.mxu0 0.0
        %494 = vmatpush2.msra.mxu0 0.0
        %495 = vmatprep.subr.mxu0 0.0
        %496 = vmatpush2.msra.mxu0 0.0
        %497 = vmatprep.subr.mxu0 0.0
        %498 = vmatpush2.msra.mxu0 0.0
        %499 = vmatprep.subr.mxu0 0.0
        %500 = vmatpush2.msra.mxu0 0.0
        %501 = vmatprep.subr.mxu0 0.0
        %502 = vmatpush2.msra.mxu0 0.0
        %503 = vmatprep.subr.mxu0 0.0
        %504 = vmatpush2.msra.mxu0 0.0
        %505 = vmatprep.subr.mxu0 0.0
        %506 = vmatpush2.msra.mxu0 0.0
        %507 = vmatprep.subr.mxu0 0.0
        %508 = vmatpush2.msra.mxu0 0.0
        %509 = vmatprep.subr.mxu0 0.0
        %510 = vmatpush2.msra.mxu0 0.0
        %511 = vmatprep.subr.mxu0 0.0
        %512 = vmatpush2.msra.mxu0 0.0
        %513 = vmatprep.subr.mxu0 0.0
        %514 = vmatpush2.msra.mxu0 0.0
        %515 = vmatprep.subr.mxu0 0.0
        %516 = vmatpush2.msra.mxu0 0.0
        %517 = vmatprep.subr.mxu0 0.0
        %518 = vmatpush2.msra.mxu0 0.0
        %519 = vmatprep.subr.mxu0 0.0
        %520 = vmatpush2.msra.mxu0 0.0
        %521 = vmatprep.subr.mxu0 0.0
        %522 = vmatpush2.msra.mxu0 0.0
        %523 = vmatprep.mubr.f32.mxu0 0.0
        %524 = vmatmul.mubr.f32.gmra.mxu0 %v363
        %v525 = vpop.f32.mrf.mxu0
        %v526 = vadd.f32 0.0, %v525
        %v527 = vpop.f32.mrf.mxu0
        %528 = vmatprep.mubr.f32.mxu0 0.0
        %529 = vmatmul.mubr.f32.gmra.mxu0 %v366
        %v530 = vpop.f32.mrf.mxu0
        %v531 = vadd.f32 0.0, %v530
        %v532 = vpop.f32.mrf.mxu0
        %533 = vmatprep.mubr.f32.mxu0 0.0
        %534 = vmatmul.mubr.f32.gmra.mxu0 %v369
        %v535 = vpop.f32.mrf.mxu0
        %v536 = vadd.f32 0.0, %v535
        %v537 = vpop.f32.mrf.mxu0
        %538 = vmatprep.mubr.f32.mxu0 0.0
        %539 = vmatmul.mubr.f32.gmra.mxu0 %v372
        %v540 = vpop.f32.mrf.mxu0
        %v541 = vadd.f32 0.0, %v540
        %v542 = vpop.f32.mrf.mxu0
        %543 = vdwg.mxu0
        %544 = vmatprep.subr.mxu0 0.0
        %545 = vmatpush1.msra.mxu0 0.0
        %546 = vmatprep.subr.mxu0 0.0
        %547 = vmatpush1.msra.mxu0 0.0
        %548 = vmatprep.subr.mxu0 0.0
        %549 = vmatpush1.msra.mxu0 0.0
        %550 = vmatprep.subr.mxu0 0.0
        %551 = vmatpush1.msra.mxu0 0.0
        %552 = vmatprep.subr.mxu0 0.0
        %553 = vmatpush1.msra.mxu0 0.0
        %554 = vmatprep.subr.mxu0 0.0
        %555 = vmatpush1.msra.mxu0 0.0
        %556 = vmatprep.subr.mxu0 0.0
        %557 = vmatpush1.msra.mxu0 0.0
        %558 = vmatprep.subr.mxu0 0.0
        %559 = vmatpush1.msra.mxu0 0.0
        %560 = vmatprep.subr.mxu0 0.0
        %561 = vmatpush1.msra.mxu0 0.0
        %562 = vmatprep.subr.mxu0 0.0
        %563 = vmatpush1.msra.mxu0 0.0
        %564 = vmatprep.subr.mxu0 0.0
        %565 = vmatpush1.msra.mxu0 0.0
        %566 = vmatprep.subr.mxu0 0.0
        %567 = vmatpush1.msra.mxu0 0.0
        %568 = vmatprep.subr.mxu0 0.0
        %569 = vmatpush1.msra.mxu0 0.0
        %570 = vmatprep.subr.mxu0 0.0
        %571 = vmatpush1.msra.mxu0 0.0
        %572 = vmatprep.subr.mxu0 0.0
        %573 = vmatpush1.msra.mxu0 %v345
        %574 = vmatprep.subr.mxu0 0.0
        %575 = vmatpush1.msra.mxu0 %v340
        %576 = vmatprep.subr.mxu0 0.0
        %577 = vmatpush2.msra.mxu0 0.0
        %578 = vmatprep.subr.mxu0 0.0
        %579 = vmatpush2.msra.mxu0 0.0
        %580 = vmatprep.subr.mxu0 0.0
        %581 = vmatpush2.msra.mxu0 0.0
        %582 = vmatprep.subr.mxu0 0.0
        %583 = vmatpush2.msra.mxu0 0.0
        %584 = vmatprep.subr.mxu0 0.0
        %585 = vmatpush2.msra.mxu0 0.0
        %586 = vmatprep.subr.mxu0 0.0
        %587 = vmatpush2.msra.mxu0 0.0
        %588 = vmatprep.subr.mxu0 0.0
        %589 = vmatpush2.msra.mxu0 0.0
        %590 = vmatprep.subr.mxu0 0.0
        %591 = vmatpush2.msra.mxu0 0.0
        %592 = vmatprep.subr.mxu0 0.0
        %593 = vmatpush2.msra.mxu0 0.0
        %594 = vmatprep.subr.mxu0 0.0
        %595 = vmatpush2.msra.mxu0 0.0
        %596 = vmatprep.subr.mxu0 0.0
        %597 = vmatpush2.msra.mxu0 0.0
        %598 = vmatprep.subr.mxu0 0.0
        %599 = vmatpush2.msra.mxu0 0.0
        %600 = vmatprep.subr.mxu0 0.0
        %601 = vmatpush2.msra.mxu0 0.0
        %602 = vmatprep.subr.mxu0 0.0
        %603 = vmatpush2.msra.mxu0 0.0
        %604 = vmatprep.subr.mxu0 0.0
        %605 = vmatpush2.msra.mxu0 0.0
        %606 = vmatprep.subr.mxu0 0.0
        %607 = vmatpush2.msra.mxu0 0.0
        %608 = vmatprep.mubr.f32.mxu0 0.0
        %609 = vmatmul.mubr.f32.gmra.mxu0 %v363
        %v610 = vpop.f32.mrf.mxu0
        %v611 = vadd.f32 0.0, %v610
        %v612 = vpop.f32.mrf.mxu0
        %613 = vmatprep.mubr.f32.mxu0 0.0
        %614 = vmatmul.mubr.f32.gmra.mxu0 %v366
        %v615 = vpop.f32.mrf.mxu0
        %v616 = vadd.f32 0.0, %v615
        %v617 = vpop.f32.mrf.mxu0
        %618 = vmatprep.mubr.f32.mxu0 0.0
        %619 = vmatmul.mubr.f32.gmra.mxu0 %v369
        %v620 = vpop.f32.mrf.mxu0
        %v621 = vadd.f32 0.0, %v620
        %v622 = vpop.f32.mrf.mxu0
        %623 = vmatprep.mubr.f32.mxu0 0.0
        %624 = vmatmul.mubr.f32.gmra.mxu0 %v372
        %v625 = vpop.f32.mrf.mxu0
        %v626 = vadd.f32 0.0, %v625
        %v627 = vpop.f32.mrf.mxu0
        %628 = vdwg.mxu0
        %629 = vmatprep.subr.mxu0 0.0
        %630 = vmatpush1.msra.mxu0 0.0
        %631 = vmatprep.subr.mxu0 0.0
        %632 = vmatpush1.msra.mxu0 0.0
        %633 = vmatprep.subr.mxu0 0.0
        %634 = vmatpush1.msra.mxu0 0.0
        %635 = vmatprep.subr.mxu0 0.0
        %636 = vmatpush1.msra.mxu0 0.0
        %637 = vmatprep.subr.mxu0 0.0
        %638 = vmatpush1.msra.mxu0 0.0
        %639 = vmatprep.subr.mxu0 0.0
        %640 = vmatpush1.msra.mxu0 0.0
        %641 = vmatprep.subr.mxu0 0.0
        %642 = vmatpush1.msra.mxu0 0.0
        %643 = vmatprep.subr.mxu0 0.0
        %644 = vmatpush1.msra.mxu0 0.0
        %645 = vmatprep.subr.mxu0 0.0
        %646 = vmatpush1.msra.mxu0 0.0
        %647 = vmatprep.subr.mxu0 0.0
        %648 = vmatpush1.msra.mxu0 0.0
        %649 = vmatprep.subr.mxu0 0.0
        %650 = vmatpush1.msra.mxu0 0.0
        %651 = vmatprep.subr.mxu0 0.0
        %652 = vmatpush1.msra.mxu0 0.0
        %653 = vmatprep.subr.mxu0 0.0
        %654 = vmatpush1.msra.mxu0 0.0
        %655 = vmatprep.subr.mxu0 0.0
        %656 = vmatpush1.msra.mxu0 0.0
        %657 = vmatprep.subr.mxu0 0.0
        %658 = vmatpush1.msra.mxu0 %v355
        %659 = vmatprep.subr.mxu0 0.0
        %660 = vmatpush1.msra.mxu0 %v350
        %661 = vmatprep.subr.mxu0 0.0
        %662 = vmatpush2.msra.mxu0 0.0
        %663 = vmatprep.subr.mxu0 0.0
        %664 = vmatpush2.msra.mxu0 0.0
        %665 = vmatprep.subr.mxu0 0.0
        %666 = vmatpush2.msra.mxu0 0.0
        %667 = vmatprep.subr.mxu0 0.0
        %668 = vmatpush2.msra.mxu0 0.0
        %669 = vmatprep.subr.mxu0 0.0
        %670 = vmatpush2.msra.mxu0 0.0
        %671 = vmatprep.subr.mxu0 0.0
        %672 = vmatpush2.msra.mxu0 0.0
        %673 = vmatprep.subr.mxu0 0.0
        %674 = vmatpush2.msra.mxu0 0.0
        %675 = vmatprep.subr.mxu0 0.0
        %676 = vmatpush2.msra.mxu0 0.0
        %677 = vmatprep.subr.mxu0 0.0
        %678 = vmatpush2.msra.mxu0 0.0
        %679 = vmatprep.subr.mxu0 0.0
        %680 = vmatpush2.msra.mxu0 0.0
        %681 = vmatprep.subr.mxu0 0.0
        %682 = vmatpush2.msra.mxu0 0.0
        %683 = vmatprep.subr.mxu0 0.0
        %684 = vmatpush2.msra.mxu0 0.0
        %685 = vmatprep.subr.mxu0 0.0
        %686 = vmatpush2.msra.mxu0 0.0
        %687 = vmatprep.subr.mxu0 0.0
        %688 = vmatpush2.msra.mxu0 0.0
        %689 = vmatprep.subr.mxu0 0.0
        %690 = vmatpush2.msra.mxu0 0.0
        %691 = vmatprep.subr.mxu0 0.0
        %692 = vmatpush2.msra.mxu0 0.0
        %693 = vmatprep.mubr.f32.mxu0 0.0
        %694 = vmatmul.mubr.f32.gmra.mxu0 %v363
        %v695 = vpop.f32.mrf.mxu0
        %v696 = vadd.f32 0.0, %v695
        %v697 = vpop.f32.mrf.mxu0
        %698 = vmatprep.mubr.f32.mxu0 0.0
        %699 = vmatmul.mubr.f32.gmra.mxu0 %v366
        %v700 = vpop.f32.mrf.mxu0
        %v701 = vadd.f32 0.0, %v700
        %v702 = vpop.f32.mrf.mxu0
        %703 = vmatprep.mubr.f32.mxu0 0.0
        %704 = vmatmul.mubr.f32.gmra.mxu0 %v369
        %v705 = vpop.f32.mrf.mxu0
        %v706 = vadd.f32 0.0, %v705
        %v707 = vpop.f32.mrf.mxu0
        %708 = vmatprep.mubr.f32.mxu0 0.0
        %709 = vmatmul.mubr.f32.gmra.mxu0 %v372
        %v710 = vpop.f32.mrf.mxu0
        %v711 = vadd.f32 0.0, %v710
        %v712 = vpop.f32.mrf.mxu0
        %713 = vdwg.mxu0
        %vm714 = vcmask 261120
        %715 = vst.msk [vmem:[%s217] sm:$0xff] %vm714, %v441
        %716 = vst.msk [vmem:[%s217 + $0x8] sm:$0xff] %vm714, %v446
        %717 = vst.msk [vmem:[%s217 + $0x10] sm:$0xff] %vm714, %v451
        %718 = vst.msk [vmem:[%s217 + $0x18] sm:$0xff] %vm714, %v456
        %719 = vst.msk [vmem:[%s217 + $0x20] sm:$0xff] %vm714, %v526
        %720 = vst.msk [vmem:[%s217 + $0x28] sm:$0xff] %vm714, %v531
        %721 = vst.msk [vmem:[%s217 + $0x30] sm:$0xff] %vm714, %v536
        %722 = vst.msk [vmem:[%s217 + $0x38] sm:$0xff] %vm714, %v541
        %723 = vst.msk [vmem:[%s217 + $0x40] sm:$0xff] %vm714, %v611
        %724 = vst.msk [vmem:[%s217 + $0x48] sm:$0xff] %vm714, %v616
        %725 = vst.msk [vmem:[%s217 + $0x50] sm:$0xff] %vm714, %v621
        %726 = vst.msk [vmem:[%s217 + $0x58] sm:$0xff] %vm714, %v626
        %727 = vst.msk [vmem:[%s217 + $0x60] sm:$0xff] %vm714, %v696
        %728 = vst.msk [vmem:[%s217 + $0x68] sm:$0xff] %vm714, %v701
        %729 = vst.msk [vmem:[%s217 + $0x70] sm:$0xff] %vm714, %v706
        %730 = vst.msk [vmem:[%s217 + $0x78] sm:$0xff] %vm714, %v711
        %s731 = sand.u32 %s97, 1
        %s732 = scalar_lea.sflag [#allocation4], %s731
        %s733 = sand.u32 %s97, 1
        %s734 = smul.addr %s733, 128
        %s735 = scalar_lea.vmem [#allocation8], %s734
        // Predicated region
        $region45: #{upsample2d_bilinear.1} parent=31 // pred_check
          %p736 = pneg %p107
        $region46: #{upsample2d_bilinear.1} parent=31 // pred_check_branch
          %738 = sbr.rel (%p736) target = $region48
        $region47: #{upsample2d_bilinear.1} parent=31 // pred_region
          %s740 = ssub.s32 2048, 2048
          %741 = vsyncadd %s732, %s740
          %s742 = smul.addr %s21, 16
          %s743 = smul.addr %s742, 128
          %s744 = scalar_lea.hbm %s3, %s743
          %s745 = sshll.u32 %s735, 4
          %s746 = int_to_ptr.vmem [resolvable:$true] %s745
          %751 = dma.vmem_to_hbm [thread:$0]  %s746, 2048, %s744, %s732, 128, 128, 8
        $region48: #{upsample2d_bilinear.1} parent=31 // pred_fallthru
          _
      $region32: #{upsample2d_bilinear.1} parent=5 // pred_fallthru
        _
      %p752 = scmp.le.s32.totalorder 2, %s16
      // Predicated region
      $region49: #{upsample2d_bilinear.1} parent=5 // pred_check
        %p753 = pneg %p752
      $region50: #{upsample2d_bilinear.1} parent=5 // pred_check_branch
        %755 = sbr.rel (%p753) target = $region52
      $region51: #{upsample2d_bilinear.1} parent=5 // pred_region
        %s756 = ssub.s32 %s16, 2
        // Predicated region
        $region53: #{upsample2d_bilinear.1} parent=51 // pred_check
          %p757 = pneg %p113
        $region54: #{upsample2d_bilinear.1} parent=51 // pred_check_branch
          %759 = sbr.rel (%p757) target = $region56
        $region55: #{upsample2d_bilinear.1} parent=51 // pred_region
          %s760 = sand.u32 %s98, 1
          %s761 = scalar_lea.sflag [#allocation4], %s760
          %s762 = sand.u32 %s98, 1
          %s763 = smul.addr %s762, 128
          %s764 = scalar_lea.vmem [#allocation8], %s763
          %765 = dma.done %s761, 2048
        $region56: #{upsample2d_bilinear.1} parent=51 // pred_fallthru
          _
      $region52: #{upsample2d_bilinear.1} parent=5 // pred_fallthru
        _
    $region6: #{upsample2d_bilinear.1} parent=1 // loop_footer
      %s20 = sadd.s32 1, %s16
    $region7: #{upsample2d_bilinear.1} parent=1 // loop_footer_branch
      %15 = sbr.rel target = $region3
    $region8: #{upsample2d_bilinear.1} parent=1 // loop_exit
      _
    %766 = vsyncpa [#allocation3], 1
    %s767 = scalar_lea.sflag [#allocation3], 1
    %768 = vsyncpa %s767, 1
    %769 = vsyncpa [#allocation6], 1
    %770 = vsyncpa [#allocation4], 1
    %s771 = scalar_lea.sflag [#allocation4], 1
    %772 = vsyncpa %s771, 1

</llo_original>
